<compile_context>
chip_gen: v7x
topology: tpu7x:2x2x1
jax: 0.10.0
libtpu: 0.0.40
codegen_flags: <defaults>
</compile_context>

<pallas_src>
import jax
import jax.numpy as jnp
from jax.experimental import pallas as pl
from jax.experimental.pallas import tpu as pltpu

_NEG_BIG = -1.0e30  # padding value: exp(pad - rowmax) underflows to exactly 0


def softmax_kernel(z_ref, p_ref):
    # z_ref / p_ref are lane-dense padded tiles [B_pad, C_pad] (multiples of 8/128).
    z = z_ref[...].astype(jnp.float32)                     # stable f32 math
    z = z - jnp.max(z, axis=1, keepdims=True)              # max-subtracted
    e = jnp.exp(z)                                         # padded cols -> 0
    inv = pl.reciprocal(jnp.sum(e, axis=1, keepdims=True), approx=True)  # EUP
    p_ref[...] = e * inv                                   # full, unmasked store


def classifier_forward(logits):
    """softmax(logits, dim=1) — everything Classifier.forward actually returns."""
    B, C = logits.shape
    B_pad = ((B + 7) // 8) * 8          # f32 sublane multiple
    C_pad = ((C + 127) // 128) * 128    # lane multiple -> unmasked vst

    z = jnp.pad(
        logits.astype(jnp.float32),
        ((0, B_pad - B), (0, C_pad - C)),
        constant_values=_NEG_BIG,
    )

    vmem = pl.BlockSpec(memory_space=pltpu.MemorySpace.VMEM)
    probs_padded = pl.pallas_call(
        softmax_kernel,
        out_shape=jax.ShapeDtypeStruct((B_pad, C_pad), jnp.float32),
        in_specs=[vmem],
        out_specs=vmem,
    )(z)

    return probs_padded[:B, :C]


if __name__ == "__main__":
    # Small shapes consistent with the module: the forward's output is
    # softmax over bert(...).logits, dim=1.  n_outputs / logits class dim = 2.
    # (hidden_size / fc widths never reach the output — that branch is dead.)
    B = 8   # >= 8 rows so f32 sublanes are fully used (perf feedback)
    C = 2   # class dimension of the synthetic bert logits

    key = jax.random.PRNGKey(0)
    logits = jax.random.normal(key, (B, C), jnp.float32)   # bert(**kwargs).logits

    probs = classifier_forward(logits)
    probs = jax.block_until_ready(probs)

    # sanity: matches a reference softmax and rows sum to 1
    assert probs.shape == (B, C)
    ref = jax.nn.softmax(logits, axis=1)
    assert bool(jnp.all(jnp.abs(probs - ref) < 1e-2))
    assert bool(jnp.all(jnp.abs(jnp.sum(probs, axis=1) - 1.0) < 1e-2))

    print("KERNEL_OK")
</pallas_src>

<mosaic_0001>
module attributes {stable_mosaic.version = 11 : i64} {
  func.func @softmax_kernel(%arg0: memref<8x128xf32, #tpu.memory_space<vmem>>, %arg1: memref<8x128xf32, #tpu.memory_space<vmem>>) attributes {dimension_semantics = [], scalar_prefetch = 0 : i64, scratch_operands = 0 : i64, tpu.core_type = #tpu.core_type<tc>} {
    %c0 = arith.constant 0 : index
    %c0_0 = arith.constant 0 : index
    %0 = vector.load %arg0[%c0, %c0_0] : memref<8x128xf32, #tpu.memory_space<vmem>>, vector<8x128xf32>
    %cst = arith.constant dense<0xFF800000> : vector<8xf32>
    %1 = vector.multi_reduction <maximumf>, %0, %cst [1] : vector<8x128xf32> to vector<8xf32>
    %2 = vector.shape_cast %1 : vector<8xf32> to vector<8x1xf32>
    %3 = vector.broadcast %2 : vector<8x1xf32> to vector<8x128xf32>
    %4 = arith.subf %0, %3 : vector<8x128xf32>
    %5 = math.exp %4 : vector<8x128xf32>
    %cst_1 = arith.constant dense<0.000000e+00> : vector<8xf32>
    %6 = vector.multi_reduction <add>, %5, %cst_1 [1] : vector<8x128xf32> to vector<8xf32>
    %7 = vector.shape_cast %6 : vector<8xf32> to vector<8x1xf32>
    %8 = tpu.reciprocal %7 {approx = true} : vector<8x1xf32> -> vector<8x1xf32>
    %9 = vector.broadcast %8 : vector<8x1xf32> to vector<8x128xf32>
    %10 = arith.mulf %5, %9 : vector<8x128xf32>
    %c0_2 = arith.constant 0 : index
    %c0_3 = arith.constant 0 : index
    %11 = vector.load %arg1[%c0_2, %c0_3] : memref<8x128xf32, #tpu.memory_space<vmem>>, vector<8x128xf32>
    tpu.vector_store %arg1[%c0_2, %c0_3], %10 {strides = array<i32>} : memref<8x128xf32, #tpu.memory_space<vmem>>, vector<8x128xf32>,
    return
  }
}

</mosaic_0001>

<llo_original>
// kernel: tpu_custom_call.1
$region0: #{tpu_custom_call.1}
  #allocation0 [shape = 'u32[]', space=smem, size = 0x4, offset = 0x4, fixed_abs, tag = 'smem constant byte address 0x4 - core index']
  #allocation1 [shape = 'u32[144,128]{1,0:T(1,128)}', space=vmem, size = 0x12000, scoped, tag = 'internal scratch']
  %s0 = inlined_call_operand.hbm [shape: f32[8,128], index: 0, kind: input, shape index: {}]
  %s1 = inlined_call_operand.hbm [shape: f32[8,128], index: 1, kind: output, shape index: {}]
  %s2 = sld [smem:[#allocation0]]
  $region18: #{tpu_custom_call.1} parent=0
    _
  %s4 = ssub.s32 1, %s2
  %s5 = scalar_select 0, %s4, %s2
  $region1: #{tpu_custom_call.1} parent=0
    #allocation2 [shape = 'u8[4096]{0}', space=vmem, size = 0x1000, scoped, tag = 'input window, operand 0, single buffered']
    #allocation3 [shape = 's32[1]{0}', space=sflag, size = 0x4, scoped, tag = 'scoped memory for tpu_custom_call.1']
    #allocation4 [shape = 's32[1]{0}', space=sflag, size = 0x4, scoped, tag = 'scoped memory for tpu_custom_call.1']
    #allocation5 [shape = 'u8[4096]{0}', space=vmem, size = 0x1000, scoped, tag = 'output window, operand 0, single buffered']
    %6 = vsyncpa [#allocation3], 0
    %7 = vsyncpa [#allocation4], 0
    // Predicated region
    $region2: #{tpu_custom_call.1} parent=1 // pred_check
      _
    $region3: #{tpu_custom_call.1} parent=1 // pred_check_branch
      %9 = sbr.rel (0) target = $region5
    $region4: #{tpu_custom_call.1} parent=1 // pred_region
      %s11 = ssub.s32 128, 128
      %12 = vsyncadd [#allocation3], %s11
      %s14 = sshll.u32 [#allocation2], 4
      %s15 = int_to_ptr.vmem [resolvable:$true] %s14
      %17 = dma.hbm_to_vmem [thread:$0]  %s0, 128, %s15, [#allocation3]
    $region5: #{tpu_custom_call.1} parent=1 // pred_fallthru
      _
    // Predicated region
    $region6: #{tpu_custom_call.1} parent=1 // pred_check
      _
    $region7: #{tpu_custom_call.1} parent=1 // pred_check_branch
      %19 = sbr.rel (0) target = $region9
    $region8: #{tpu_custom_call.1} parent=1 // pred_region
      %20 = dma.done [#allocation3], 128
    $region9: #{tpu_custom_call.1} parent=1 // pred_fallthru
      _
    %v21 = vld [vmem:[#allocation2] sm:$0xff]
    %22 = vmax.xlane.f32.xlu0 %v21
    %v23 = vpop.xlane.xlu0 %22
    %v24 = vsub.f32 %v21, %v23
    %v25 = vmul.f32 %v24, 1.442695
    %v26 = vpow.pop %v25
    %27 = vadd.xlane.f32.xlu0 %v26
    %v28 = vpop.xlane.xlu0 %27
    %v29 = vrcp.pop %v28
    %v30 = vmul.f32 %v26, %v29
    %31 = vst [vmem:[#allocation5] sm:$0xff] %v30
    // Predicated region
    $region10: #{tpu_custom_call.1} parent=1 // pred_check
      _
    $region11: #{tpu_custom_call.1} parent=1 // pred_check_branch
      %33 = sbr.rel (0) target = $region13
    $region12: #{tpu_custom_call.1} parent=1 // pred_region
      %s35 = ssub.s32 128, 128
      %36 = vsyncadd [#allocation4], %s35
      %s38 = sshll.u32 [#allocation5], 4
      %s39 = int_to_ptr.vmem [resolvable:$true] %s38
      %41 = dma.vmem_to_hbm [thread:$0]  %s39, 128, %s1, [#allocation4]
    $region13: #{tpu_custom_call.1} parent=1 // pred_fallthru
      _
    // Predicated region
    $region14: #{tpu_custom_call.1} parent=1 // pred_check
      _
    $region15: #{tpu_custom_call.1} parent=1 // pred_check_branch
      %43 = sbr.rel (0) target = $region17
    $region16: #{tpu_custom_call.1} parent=1 // pred_region
      %44 = dma.done [#allocation4], 128
    $region17: #{tpu_custom_call.1} parent=1 // pred_fallthru
      _
    %45 = vsyncpa [#allocation3], 1
    %46 = vsyncpa [#allocation4], 1

</llo_original>
